<compile_context>
chip_gen: v5e
topology: v5e:2x2
jax: 0.10.0
libtpu: 0.0.40
codegen_flags: <defaults>
</compile_context>

<pallas_src>
import functools

import numpy as np
import jax
import jax.numpy as jnp
from jax import lax
from jax.experimental import pallas as pl
from jax.experimental.pallas import tpu as pltpu


def _round_up(x, m):
    return (x + m - 1) // m * m


# ---------------------------------------------------------------------------
# Pallas kernel: one conv layer tile = K taps of (rows, Cin) @ (Cin, Ct)
#   x_ref : (s, tn, Hq, Cin)   bf16  phase-decomposed, zero-padded activation
#   w_ref : (K, Cin, Ct)       bf16  weights (Ct = cout tile, lane-dense)
#   b_ref : (1, Ct)            f32   bias
#   o_ref : (tn*HOp, Ct)       bf16  output rows for this (row tile, cout tile)
# Accumulation / bias / LeakyReLU are f32; store casts to bf16.
# ---------------------------------------------------------------------------
def _conv_kernel(x_ref, w_ref, b_ref, o_ref, *, K, stride, HOp, tn, cin,
                 slope, apply_act):
    acc = None
    for k in range(K):                       # static tap loop (K = 5 or 3)
        q, r = divmod(k, stride)             # padded row = (ho + q)*s + r
        xk = x_ref[r, :, q:q + HOp, :]       # (tn, HOp, Cin) bf16
        xk = xk.reshape(tn * HOp, cin)
        if cin == 1:
            # First conv (Cin = 1): VPU outer product instead of a
            # degenerate depth-1 MXU matmul.
            p = xk.astype(jnp.float32) * w_ref[k].astype(jnp.float32)
        else:
            p = jnp.dot(xk, w_ref[k], preferred_element_type=jnp.float32)
        acc = p if acc is None else acc + p
    acc = acc + b_ref[...]                   # f32 bias, broadcast (1, Ct)
    if apply_act:
        acc = jnp.where(acc >= 0, acc, slope * acc)
    o_ref[...] = acc.astype(o_ref.dtype)


def conv_kx1_pallas(x, layer, *, target_rows=2048):
    """Conv2d with kernel (K,1), stride (s,1), pad (p,0) + bias (+ LeakyReLU)
    on activations in (N = B*period, H, C) layout.

    x: (N, H, Cin) bf16 -> (N, HO, Cout) bf16
    """
    N, H, Cin = x.shape
    K, s, pad = layer["K"], layer["stride"], layer["pad"]
    cout, cout_p = layer["cout"], layer["cout_pad"]
    ct = min(cout_p, 256)                    # lane-dense cout tile (v7x axis)
    n_co = cout_p // ct

    Hp = H + 2 * pad
    HO = (Hp - K) // s + 1
    HOp = _round_up(HO, 16)                  # 16-row aligned bf16 sublanes
    qmax = (K - 1) // s
    Hq = _round_up(max(-(-Hp // s), HOp + qmax), 8)
    Htot = Hq * s

    # Zero-pad along H (conv padding + alignment), single cheap pass.
    xp = jnp.pad(x, ((0, 0), (pad, Htot - H - pad), (0, 0))).astype(jnp.bfloat16)
    # Phase decomposition of the stride: xph[r, n, j, c] == xp[n, j*s + r, c]
    xph = jnp.transpose(xp.reshape(N, Hq, s, Cin), (2, 0, 1, 3))

    # Row tiling over N (each row tile carries all HOp output rows of tn
    # batch*period rows).  Layers with big weights use one row tile so their
    # weights stream from HBM exactly once.
    tn = min(N, max(1, target_rows // HOp))
    w_bytes = layer["w"].size * 2
    if w_bytes >= (2 << 20) and N * HOp * ct * 2 <= (8 << 20):
        tn = N
    Np = _round_up(N, tn)
    if Np != N:
        xph = jnp.pad(xph, ((0, 0), (0, Np - N), (0, 0), (0, 0)))
    nm = Np // tn

    kernel = functools.partial(_conv_kernel, K=K, stride=s, HOp=HOp, tn=tn,
                               cin=Cin, slope=layer["slope"],
                               apply_act=layer["act"])

    out = pl.pallas_call(
        kernel,
        out_shape=jax.ShapeDtypeStruct((Np * HOp, cout_p), jnp.bfloat16),
        grid_spec=pltpu.PrefetchScalarGridSpec(
            num_scalar_prefetch=0,
            grid=(nm, n_co),                                   # both parallel
            in_specs=[
                pl.BlockSpec((s, tn, Hq, Cin), lambda m, co: (0, m, 0, 0)),
                pl.BlockSpec((K, Cin, ct), lambda m, co: (0, 0, co)),
                pl.BlockSpec((1, ct), lambda m, co: (0, co)),
            ],
            out_specs=pl.BlockSpec((tn * HOp, ct), lambda m, co: (m, co)),
        ),
        compiler_params=pltpu.CompilerParams(
            dimension_semantics=("parallel", "parallel")),
    )(xph, layer["w"], layer["b"])

    return out.reshape(Np, HOp, cout_p)[:N, :HO, :cout]


# ---------------------------------------------------------------------------
# One-time parameter preparation: torch OIHW -> (K, Cin, Cout_pad) bf16
# ---------------------------------------------------------------------------
def _prep_layer(w, b, *, stride, pad, act, slope):
    cout, cin, K, _ = w.shape
    cout_p = _round_up(cout, 128)                       # lane-dense output
    wk = jnp.transpose(w[:, :, :, 0], (2, 1, 0))        # (K, Cin, Cout)
    wk = jnp.pad(wk, ((0, 0), (0, 0), (0, cout_p - cout))).astype(jnp.bfloat16)
    bp = jnp.pad(b, (0, cout_p - cout)).astype(jnp.float32).reshape(1, cout_p)
    return dict(w=wk, b=bp, K=K, stride=stride, pad=pad, act=act, slope=slope,
                cout=cout, cout_pad=cout_p)


def prepare_params(raw, kernel_size=5, stride=3, lrelu_slope=0.1):
    pad = (kernel_size - 1) // 2                        # get_padding(k, 1)
    layers = []
    for i, (w, b) in enumerate(raw["convs"]):
        s = stride if i < 6 else 1                      # last conv: stride 1
        layers.append(_prep_layer(w, b, stride=s, pad=pad,
                                  act=True, slope=lrelu_slope))
    w, b = raw["conv_post"]
    layers.append(_prep_layer(w, b, stride=1, pad=1, act=False,
                              slope=lrelu_slope))
    return layers


# ---------------------------------------------------------------------------
# DiscriminatorP forward (matches the torch module's logits exactly; fmap is
# returned in (B, period, H, C) layout unless fmap_nchw=True)
# ---------------------------------------------------------------------------
def discriminator_p_forward(x, layers, period, fmap_nchw=False):
    b, c, t = x.shape                                   # c == 1 (as in torch)
    if t % period != 0:
        n_pad = period - t % period
        x = jnp.pad(x, ((0, 0), (0, 0), (0, n_pad)), mode="reflect")
        t = t + n_pad
    H = t // period
    # torch .view(b, 1, H, period)  ->  internal (B*period, H, 1) bf16
    x = x[:, 0].reshape(b, H, period)
    x = jnp.transpose(x, (0, 2, 1)).reshape(b * period, H, 1)
    x = x.astype(jnp.bfloat16)

    fmap = []
    for layer in layers[:-1]:
        x = conv_kx1_pallas(x, layer)                   # (N, HO, C) bf16
        f = x.reshape(b, period, x.shape[1], x.shape[2])
        if fmap_nchw:
            f = jnp.transpose(f, (0, 3, 2, 1))          # torch NCHW
        fmap.append(f)
    x = conv_kx1_pallas(x, layers[-1])                  # conv_post (N, HOf, 1)
    f = x.reshape(b, period, x.shape[1], 1)
    fmap.append(jnp.transpose(f, (0, 3, 2, 1)) if fmap_nchw else f)

    # torch.flatten(x, 1, -1) on NCHW (b, 1, HOf, period)
    out = jnp.transpose(f[..., 0], (0, 2, 1)).reshape(b, -1).astype(jnp.float32)
    return out, fmap


# ---------------------------------------------------------------------------
# Deterministic synthetic parameters (weight_norm at init == plain weight)
# ---------------------------------------------------------------------------
def init_params(key, kernel_size=5):
    chans = [1, 32, 64, 128, 256, 512, 1024, 1024]
    params = {"convs": [], "conv_post": None}
    for i in range(7):
        cin, cout = chans[i], chans[i + 1]
        key, k1, k2 = jax.random.split(key, 3)
        w = jax.random.normal(k1, (cout, cin, kernel_size, 1), jnp.float32)
        w = w * np.sqrt(2.0 / (cin * kernel_size)).astype(np.float32)
        bias = 0.01 * jax.random.normal(k2, (cout,), jnp.float32)
        params["convs"].append((w, bias))
    key, k1, k2 = jax.random.split(key, 3)
    w = jax.random.normal(k1, (1, 1024, 3, 1), jnp.float32)
    w = w * np.sqrt(1.0 / (1024 * 3)).astype(np.float32)
    bias = 0.01 * jax.random.normal(k2, (1,), jnp.float32)
    params["conv_post"] = (w, bias)
    return params


# ---------------------------------------------------------------------------
# Pure-JAX reference (mirrors torch forward; bf16 matmul inputs / f32
# accumulation, same rounding points as the kernel)
# ---------------------------------------------------------------------------
def ref_forward(x, raw, period, kernel_size=5, stride=3, lrelu_slope=0.1):
    b, c, t = x.shape
    if t % period != 0:
        n_pad = period - t % period
        x = jnp.pad(x, ((0, 0), (0, 0), (0, n_pad)), mode="reflect")
        t = t + n_pad
    x = x.reshape(b, c, t // period, period)
    pad = (kernel_size - 1) // 2
    for i, (w, bias) in enumerate(raw["convs"]):
        s = stride if i < 6 else 1
        x = lax.conv_general_dilated(
            x.astype(jnp.bfloat16), w.astype(jnp.bfloat16), (s, 1),
            ((pad, pad), (0, 0)),
            dimension_numbers=("NCHW", "OIHW", "NCHW"),
            preferred_element_type=jnp.float32)
        x = x + bias.reshape(1, -1, 1, 1)
        x = jnp.where(x >= 0, x, lrelu_slope * x)
    w, bias = raw["conv_post"]
    x = lax.conv_general_dilated(
        x.astype(jnp.bfloat16), w.astype(jnp.bfloat16), (1, 1),
        ((1, 1), (0, 0)),
        dimension_numbers=("NCHW", "OIHW", "NCHW"),
        preferred_element_type=jnp.float32)
    x = x + bias.reshape(1, -1, 1, 1)
    return x.reshape(b, -1)


if __name__ == "__main__":
    key = jax.random.PRNGKey(0)
    kp, kx = jax.random.split(key)
    raw_params = init_params(kp)
    layers = prepare_params(raw_params)

    # small input consistent with the module: (batch=2, channels=1, time=45)
    B, C, T = 2, 1, 45
    period = 2
    x = jax.random.normal(kx, (B, C, T), jnp.float32)

    out, fmap = discriminator_p_forward(x, layers, period)
    out = jax.block_until_ready(out)
    _ = [jax.block_until_ready(f) for f in fmap]

    ref = ref_forward(x, raw_params, period)
    np.testing.assert_allclose(np.asarray(out), np.asarray(ref),
                               rtol=5e-2, atol=2e-2)
    assert len(fmap) == 8  # 7 convs + conv_post
    print("KERNEL_OK")
</pallas_src>

<mosaic_0001>
module attributes {stable_mosaic.version = 11 : i64} {
  func.func @_conv_kernel(%arg0: i32, %arg1: i32, %arg2: memref<3x4x24x1xbf16, #tpu.memory_space<vmem>>, %arg3: memref<5x1x128xbf16, #tpu.memory_space<vmem>>, %arg4: memref<1x128xf32, #tpu.memory_space<vmem>>, %arg5: memref<64x128xbf16, #tpu.memory_space<vmem>>) attributes {dimension_semantics = [#tpu.dimension_semantics<parallel>, #tpu.dimension_semantics<parallel>], iteration_bounds = array<i64: 1, 1>, scalar_prefetch = 0 : i64, scratch_operands = 0 : i64, tpu.core_type = #tpu.core_type<tc>, window_params = [{transform_indices = @transform_0, window_bounds = array<i64: 3, 4, 24, 1>}, {transform_indices = @transform_1, window_bounds = array<i64: 5, 1, 128>}, {transform_indices = @transform_2, window_bounds = array<i64: 1, 128>}, {transform_indices = @transform_3, window_bounds = array<i64: 64, 128>}]} {
    %c0 = arith.constant 0 : index
    %c0_0 = arith.constant 0 : index
    %c0_1 = arith.constant 0 : index
    %c0_2 = arith.constant 0 : index
    %0 = vector.load %arg2[%c0, %c0_0, %c0_1, %c0_2] : memref<3x4x24x1xbf16, #tpu.memory_space<vmem>>, vector<1x4x16x1xbf16>
    %1 = vector.shape_cast %0 : vector<1x4x16x1xbf16> to vector<4x16x1xbf16>
    %2 = vector.shape_cast %1 : vector<4x16x1xbf16> to vector<64x1xbf16>
    %3 = arith.extf %2 : vector<64x1xbf16> to vector<64x1xf32>
    %c0_3 = arith.constant 0 : index
    %c0_4 = arith.constant 0 : index
    %c0_5 = arith.constant 0 : index
    %4 = vector.load %arg3[%c0_3, %c0_4, %c0_5] : memref<5x1x128xbf16, #tpu.memory_space<vmem>>, vector<1x1x128xbf16>
    %5 = vector.shape_cast %4 : vector<1x1x128xbf16> to vector<1x128xbf16>
    %6 = arith.extf %5 : vector<1x128xbf16> to vector<1x128xf32>
    %7 = vector.broadcast %3 : vector<64x1xf32> to vector<64x128xf32>
    %8 = vector.broadcast %6 : vector<1x128xf32> to vector<64x128xf32>
    %9 = arith.mulf %7, %8 : vector<64x128xf32>
    %c1 = arith.constant 1 : index
    %c0_6 = arith.constant 0 : index
    %c0_7 = arith.constant 0 : index
    %c0_8 = arith.constant 0 : index
    %10 = vector.load %arg2[%c1, %c0_6, %c0_7, %c0_8] : memref<3x4x24x1xbf16, #tpu.memory_space<vmem>>, vector<1x4x16x1xbf16>
    %11 = vector.shape_cast %10 : vector<1x4x16x1xbf16> to vector<4x16x1xbf16>
    %12 = vector.shape_cast %11 : vector<4x16x1xbf16> to vector<64x1xbf16>
    %13 = arith.extf %12 : vector<64x1xbf16> to vector<64x1xf32>
    %c1_9 = arith.constant 1 : index
    %c0_10 = arith.constant 0 : index
    %c0_11 = arith.constant 0 : index
    %14 = vector.load %arg3[%c1_9, %c0_10, %c0_11] : memref<5x1x128xbf16, #tpu.memory_space<vmem>>, vector<1x1x128xbf16>
    %15 = vector.shape_cast %14 : vector<1x1x128xbf16> to vector<1x128xbf16>
    %16 = arith.extf %15 : vector<1x128xbf16> to vector<1x128xf32>
    %17 = vector.broadcast %13 : vector<64x1xf32> to vector<64x128xf32>
    %18 = vector.broadcast %16 : vector<1x128xf32> to vector<64x128xf32>
    %19 = arith.mulf %17, %18 : vector<64x128xf32>
    %20 = arith.addf %9, %19 : vector<64x128xf32>
    %c2 = arith.constant 2 : index
    %c0_12 = arith.constant 0 : index
    %c0_13 = arith.constant 0 : index
    %c0_14 = arith.constant 0 : index
    %21 = vector.load %arg2[%c2, %c0_12, %c0_13, %c0_14] : memref<3x4x24x1xbf16, #tpu.memory_space<vmem>>, vector<1x4x16x1xbf16>
    %22 = vector.shape_cast %21 : vector<1x4x16x1xbf16> to vector<4x16x1xbf16>
    %23 = vector.shape_cast %22 : vector<4x16x1xbf16> to vector<64x1xbf16>
    %24 = arith.extf %23 : vector<64x1xbf16> to vector<64x1xf32>
    %c2_15 = arith.constant 2 : index
    %c0_16 = arith.constant 0 : index
    %c0_17 = arith.constant 0 : index
    %25 = vector.load %arg3[%c2_15, %c0_16, %c0_17] : memref<5x1x128xbf16, #tpu.memory_space<vmem>>, vector<1x1x128xbf16>
    %26 = vector.shape_cast %25 : vector<1x1x128xbf16> to vector<1x128xbf16>
    %27 = arith.extf %26 : vector<1x128xbf16> to vector<1x128xf32>
    %28 = vector.broadcast %24 : vector<64x1xf32> to vector<64x128xf32>
    %29 = vector.broadcast %27 : vector<1x128xf32> to vector<64x128xf32>
    %30 = arith.mulf %28, %29 : vector<64x128xf32>
    %31 = arith.addf %20, %30 : vector<64x128xf32>
    %c0_18 = arith.constant 0 : index
    %c0_19 = arith.constant 0 : index
    %c1_20 = arith.constant 1 : index
    %c0_21 = arith.constant 0 : index
    %32 = vector.load %arg2[%c0_18, %c0_19, %c1_20, %c0_21] : memref<3x4x24x1xbf16, #tpu.memory_space<vmem>>, vector<1x4x16x1xbf16>
    %33 = vector.shape_cast %32 : vector<1x4x16x1xbf16> to vector<4x16x1xbf16>
    %34 = vector.shape_cast %33 : vector<4x16x1xbf16> to vector<64x1xbf16>
    %35 = arith.extf %34 : vector<64x1xbf16> to vector<64x1xf32>
    %c3 = arith.constant 3 : index
    %c0_22 = arith.constant 0 : index
    %c0_23 = arith.constant 0 : index
    %36 = vector.load %arg3[%c3, %c0_22, %c0_23] : memref<5x1x128xbf16, #tpu.memory_space<vmem>>, vector<1x1x128xbf16>
    %37 = vector.shape_cast %36 : vector<1x1x128xbf16> to vector<1x128xbf16>
    %38 = arith.extf %37 : vector<1x128xbf16> to vector<1x128xf32>
    %39 = vector.broadcast %35 : vector<64x1xf32> to vector<64x128xf32>
    %40 = vector.broadcast %38 : vector<1x128xf32> to vector<64x128xf32>
    %41 = arith.mulf %39, %40 : vector<64x128xf32>
    %42 = arith.addf %31, %41 : vector<64x128xf32>
    %c1_24 = arith.constant 1 : index
    %c0_25 = arith.constant 0 : index
    %c1_26 = arith.constant 1 : index
    %c0_27 = arith.constant 0 : index
    %43 = vector.load %arg2[%c1_24, %c0_25, %c1_26, %c0_27] : memref<3x4x24x1xbf16, #tpu.memory_space<vmem>>, vector<1x4x16x1xbf16>
    %44 = vector.shape_cast %43 : vector<1x4x16x1xbf16> to vector<4x16x1xbf16>
    %45 = vector.shape_cast %44 : vector<4x16x1xbf16> to vector<64x1xbf16>
    %46 = arith.extf %45 : vector<64x1xbf16> to vector<64x1xf32>
    %c4 = arith.constant 4 : index
    %c0_28 = arith.constant 0 : index
    %c0_29 = arith.constant 0 : index
    %47 = vector.load %arg3[%c4, %c0_28, %c0_29] : memref<5x1x128xbf16, #tpu.memory_space<vmem>>, vector<1x1x128xbf16>
    %48 = vector.shape_cast %47 : vector<1x1x128xbf16> to vector<1x128xbf16>
    %49 = arith.extf %48 : vector<1x128xbf16> to vector<1x128xf32>
    %50 = vector.broadcast %46 : vector<64x1xf32> to vector<64x128xf32>
    %51 = vector.broadcast %49 : vector<1x128xf32> to vector<64x128xf32>
    %52 = arith.mulf %50, %51 : vector<64x128xf32>
    %53 = arith.addf %42, %52 : vector<64x128xf32>
    %c0_30 = arith.constant 0 : index
    %c0_31 = arith.constant 0 : index
    %54 = vector.load %arg4[%c0_30, %c0_31] : memref<1x128xf32, #tpu.memory_space<vmem>>, vector<1x128xf32>
    %55 = vector.broadcast %54 : vector<1x128xf32> to vector<64x128xf32>
    %56 = arith.addf %53, %55 : vector<64x128xf32>
    %cst = arith.constant 0.000000e+00 : f32
    %57 = vector.broadcast %cst : f32 to vector<64x128xf32>
    %58 = arith.cmpf oge, %56, %57 : vector<64x128xf32>
    %cst_32 = arith.constant 1.000000e-01 : f32
    %59 = vector.broadcast %cst_32 : f32 to vector<64x128xf32>
    %60 = arith.mulf %59, %56 : vector<64x128xf32>
    %61 = arith.select %58, %56, %60 : vector<64x128xi1>, vector<64x128xf32>
    %62 = arith.truncf %61 : vector<64x128xf32> to vector<64x128xbf16>
    %c0_33 = arith.constant 0 : index
    %c0_34 = arith.constant 0 : index
    %63 = vector.load %arg5[%c0_33, %c0_34] : memref<64x128xbf16, #tpu.memory_space<vmem>>, vector<64x128xbf16>
    tpu.vector_store %arg5[%c0_33, %c0_34], %62 {strides = array<i32>} : memref<64x128xbf16, #tpu.memory_space<vmem>>, vector<64x128xbf16>,
    return
  }
  func.func @transform_0(%arg0: i32, %arg1: i32) -> (i32, i32, i32, i32) {
    %c0_i32 = arith.constant 0 : i32
    %c0_i32_0 = arith.constant 0 : i32
    %c0_i32_1 = arith.constant 0 : i32
    %c0_i32_2 = arith.constant 0 : i32
    return %c0_i32, %arg0, %c0_i32_0, %c0_i32_1 : i32, i32, i32, i32
  }
  func.func @transform_1(%arg0: i32, %arg1: i32) -> (i32, i32, i32) {
    %c0_i32 = arith.constant 0 : i32
    %c0_i32_0 = arith.constant 0 : i32
    %c0_i32_1 = arith.constant 0 : i32
    return %c0_i32, %c0_i32_0, %arg1 : i32, i32, i32
  }
  func.func @transform_2(%arg0: i32, %arg1: i32) -> (i32, i32) {
    %c0_i32 = arith.constant 0 : i32
    %c0_i32_0 = arith.constant 0 : i32
    return %c0_i32, %arg1 : i32, i32
  }
  func.func @transform_3(%arg0: i32, %arg1: i32) -> (i32, i32) {
    %c0_i32 = arith.constant 0 : i32
    return %arg0, %arg1 : i32, i32
  }
}

</mosaic_0001>

<llo_original>
// kernel: tpu_custom_call.1
$region0: #{tpu_custom_call.1}
  #allocation0 [shape = 'u32[]', space=smem, size = 0x4, offset = 0x4, fixed_abs, tag = 'smem constant byte address 0x4 - core index']
  #allocation1 [shape = 'u32[72,128]{1,0:T(1,128)}', space=vmem, size = 0x9000, scoped, tag = 'internal scratch']
  %s0 = inlined_call_operand.vmem [shape: bf16[3,4,24,1], index: 0, kind: input, shape index: {}]
  %s1 = inlined_call_operand.vmem [shape: bf16[5,1,128], index: 1, kind: input, shape index: {}]
  %s2 = inlined_call_operand.vmem [shape: f32[1,128], index: 2, kind: input, shape index: {}]
  %s3 = inlined_call_operand.hbm [shape: bf16[64,128], index: 3, kind: output, shape index: {}]
  %s4 = sld [smem:[#allocation0]]
  $region22: #{tpu_custom_call.1} parent=0
    _
  %s6 = ssub.s32 1, %s4
  %s7 = scalar_select 0, %s6, %s4
  $region1: #{tpu_custom_call.1} parent=0
    #allocation2 [shape = 'u8[16384]{0}', space=vmem, size = 0x4000, scoped, tag = 'output window, operand 0, single buffered']
    #allocation3 [shape = 's32[1]{0}', space=sflag, size = 0x4, scoped, tag = 'scoped memory for tpu_custom_call.1']
    %8 = vsyncpa [#allocation3], 0
    // Predicated region
    $region2: #{tpu_custom_call.1} parent=1 // pred_check
      _
    $region3: #{tpu_custom_call.1} parent=1 // pred_check_branch
      %10 = sbr.rel (0) target = $region5
    $region4: #{tpu_custom_call.1} parent=1 // pred_region
      _
    $region5: #{tpu_custom_call.1} parent=1 // pred_fallthru
      _
    // Predicated region
    $region6: #{tpu_custom_call.1} parent=1 // pred_check
      _
    $region7: #{tpu_custom_call.1} parent=1 // pred_check_branch
      %12 = sbr.rel (0) target = $region9
    $region8: #{tpu_custom_call.1} parent=1 // pred_region
      _
    $region9: #{tpu_custom_call.1} parent=1 // pred_fallthru
      _
    // Predicated region
    $region10: #{tpu_custom_call.1} parent=1 // pred_check
      _
    $region11: #{tpu_custom_call.1} parent=1 // pred_check_branch
      %14 = sbr.rel (0) target = $region13
    $region12: #{tpu_custom_call.1} parent=1 // pred_region
      _
    $region13: #{tpu_custom_call.1} parent=1 // pred_fallthru
      _
    %v15 = vld [vmem:[%s0] sm:$0xf]
    %v16 = vld [vmem:[%s0 + $0x4] sm:$0xf]
    %v17 = vld [vmem:[%s0 + $0xc] sm:$0xf]
    %v18 = vld [vmem:[%s0 + $0x10] sm:$0xf]
    %v19 = vld [vmem:[%s0 + $0x18] sm:$0xf]
    %v20 = vld [vmem:[%s0 + $0x1c] sm:$0xf]
    %v21 = vld [vmem:[%s0 + $0x24] sm:$0xf]
    %v22 = vld [vmem:[%s0 + $0x28] sm:$0xf]
    %v23 = vunpack.c.l.bf16 %v15
    %v24 = vunpack.c.l.bf16 %v16
    %v25 = vunpack.c.l.bf16 %v17
    %v26 = vunpack.c.l.bf16 %v18
    %v27 = vunpack.c.l.bf16 %v19
    %v28 = vunpack.c.l.bf16 %v20
    %v29 = vunpack.c.l.bf16 %v21
    %v30 = vunpack.c.l.bf16 %v22
    %v31 = vld [vmem:[%s1] sm:$0x1]
    %v32 = vunpack.c.l.bf16 %v31
    %34 = vset.pattern.permute.xlu0 0
    %35 = vperm.xlu0 %34, %v23
    %v36 = vpop.permute.xlu0 %35
    %39 = vset.pattern.permute.xlu0 0
    %40 = vperm.xlu0 %39, %v24
    %v41 = vpop.permute.xlu0 %40
    %44 = vset.pattern.permute.xlu0 0
    %45 = vperm.xlu0 %44, %v25
    %v46 = vpop.permute.xlu0 %45
    %49 = vset.pattern.permute.xlu0 0
    %50 = vperm.xlu0 %49, %v26
    %v51 = vpop.permute.xlu0 %50
    %54 = vset.pattern.permute.xlu0 0
    %55 = vperm.xlu0 %54, %v27
    %v56 = vpop.permute.xlu0 %55
    %59 = vset.pattern.permute.xlu0 0
    %60 = vperm.xlu0 %59, %v28
    %v61 = vpop.permute.xlu0 %60
    %64 = vset.pattern.permute.xlu0 0
    %65 = vperm.xlu0 %64, %v29
    %v66 = vpop.permute.xlu0 %65
    %69 = vset.pattern.permute.xlu0 0
    %70 = vperm.xlu0 %69, %v30
    %v71 = vpop.permute.xlu0 %70
    %v73 = vperm.slane %v32, 0
    %v74 = vmul.f32 %v36, %v73
    %v75 = vmul.f32 %v41, %v73
    %v76 = vmul.f32 %v46, %v73
    %v77 = vmul.f32 %v51, %v73
    %v78 = vmul.f32 %v56, %v73
    %v79 = vmul.f32 %v61, %v73
    %v80 = vmul.f32 %v66, %v73
    %v81 = vmul.f32 %v71, %v73
    %s82 = scalar_lea.vmem %s0, 48
    %v83 = vld [vmem:[%s82] sm:$0xf]
    %v84 = vld [vmem:[%s82 + $0x4] sm:$0xf]
    %v85 = vld [vmem:[%s82 + $0xc] sm:$0xf]
    %v86 = vld [vmem:[%s82 + $0x10] sm:$0xf]
    %v87 = vld [vmem:[%s82 + $0x18] sm:$0xf]
    %v88 = vld [vmem:[%s82 + $0x1c] sm:$0xf]
    %v89 = vld [vmem:[%s82 + $0x24] sm:$0xf]
    %v90 = vld [vmem:[%s82 + $0x28] sm:$0xf]
    %v91 = vunpack.c.l.bf16 %v83
    %v92 = vunpack.c.l.bf16 %v84
    %v93 = vunpack.c.l.bf16 %v85
    %v94 = vunpack.c.l.bf16 %v86
    %v95 = vunpack.c.l.bf16 %v87
    %v96 = vunpack.c.l.bf16 %v88
    %v97 = vunpack.c.l.bf16 %v89
    %v98 = vunpack.c.l.bf16 %v90
    %s99 = scalar_lea.vmem %s1, 1
    %v100 = vld [vmem:[%s99] sm:$0x1]
    %v101 = vunpack.c.l.bf16 %v100
    %103 = vset.pattern.permute.xlu0 0
    %104 = vperm.xlu0 %103, %v91
    %v105 = vpop.permute.xlu0 %104
    %108 = vset.pattern.permute.xlu0 0
    %109 = vperm.xlu0 %108, %v92
    %v110 = vpop.permute.xlu0 %109
    %113 = vset.pattern.permute.xlu0 0
    %114 = vperm.xlu0 %113, %v93
    %v115 = vpop.permute.xlu0 %114
    %118 = vset.pattern.permute.xlu0 0
    %119 = vperm.xlu0 %118, %v94
    %v120 = vpop.permute.xlu0 %119
    %123 = vset.pattern.permute.xlu0 0
    %124 = vperm.xlu0 %123, %v95
    %v125 = vpop.permute.xlu0 %124
    %128 = vset.pattern.permute.xlu0 0
    %129 = vperm.xlu0 %128, %v96
    %v130 = vpop.permute.xlu0 %129
    %133 = vset.pattern.permute.xlu0 0
    %134 = vperm.xlu0 %133, %v97
    %v135 = vpop.permute.xlu0 %134
    %138 = vset.pattern.permute.xlu0 0
    %139 = vperm.xlu0 %138, %v98
    %v140 = vpop.permute.xlu0 %139
    %v142 = vperm.slane %v101, 0
    %v143 = vmul.f32 %v105, %v142
    %v144 = vmul.f32 %v110, %v142
    %v145 = vmul.f32 %v115, %v142
    %v146 = vmul.f32 %v120, %v142
    %v147 = vmul.f32 %v125, %v142
    %v148 = vmul.f32 %v130, %v142
    %v149 = vmul.f32 %v135, %v142
    %v150 = vmul.f32 %v140, %v142
    %v151 = vadd.f32 %v74, %v143
    %v152 = vadd.f32 %v75, %v144
    %v153 = vadd.f32 %v76, %v145
    %v154 = vadd.f32 %v77, %v146
    %v155 = vadd.f32 %v78, %v147
    %v156 = vadd.f32 %v79, %v148
    %v157 = vadd.f32 %v80, %v149
    %v158 = vadd.f32 %v81, %v150
    %s159 = scalar_lea.vmem %s0, 96
    %v160 = vld [vmem:[%s159] sm:$0xf]
    %v161 = vld [vmem:[%s159 + $0x4] sm:$0xf]
    %v162 = vld [vmem:[%s159 + $0xc] sm:$0xf]
    %v163 = vld [vmem:[%s159 + $0x10] sm:$0xf]
    %v164 = vld [vmem:[%s159 + $0x18] sm:$0xf]
    %v165 = vld [vmem:[%s159 + $0x1c] sm:$0xf]
    %v166 = vld [vmem:[%s159 + $0x24] sm:$0xf]
    %v167 = vld [vmem:[%s159 + $0x28] sm:$0xf]
    %v168 = vunpack.c.l.bf16 %v160
    %v169 = vunpack.c.l.bf16 %v161
    %v170 = vunpack.c.l.bf16 %v162
    %v171 = vunpack.c.l.bf16 %v163
    %v172 = vunpack.c.l.bf16 %v164
    %v173 = vunpack.c.l.bf16 %v165
    %v174 = vunpack.c.l.bf16 %v166
    %v175 = vunpack.c.l.bf16 %v167
    %s176 = scalar_lea.vmem %s1, 2
    %v177 = vld [vmem:[%s176] sm:$0x1]
    %v178 = vunpack.c.l.bf16 %v177
    %180 = vset.pattern.permute.xlu0 0
    %181 = vperm.xlu0 %180, %v168
    %v182 = vpop.permute.xlu0 %181
    %185 = vset.pattern.permute.xlu0 0
    %186 = vperm.xlu0 %185, %v169
    %v187 = vpop.permute.xlu0 %186
    %190 = vset.pattern.permute.xlu0 0
    %191 = vperm.xlu0 %190, %v170
    %v192 = vpop.permute.xlu0 %191
    %195 = vset.pattern.permute.xlu0 0
    %196 = vperm.xlu0 %195, %v171
    %v197 = vpop.permute.xlu0 %196
    %200 = vset.pattern.permute.xlu0 0
    %201 = vperm.xlu0 %200, %v172
    %v202 = vpop.permute.xlu0 %201
    %205 = vset.pattern.permute.xlu0 0
    %206 = vperm.xlu0 %205, %v173
    %v207 = vpop.permute.xlu0 %206
    %210 = vset.pattern.permute.xlu0 0
    %211 = vperm.xlu0 %210, %v174
    %v212 = vpop.permute.xlu0 %211
    %215 = vset.pattern.permute.xlu0 0
    %216 = vperm.xlu0 %215, %v175
    %v217 = vpop.permute.xlu0 %216
    %v219 = vperm.slane %v178, 0
    %v220 = vmul.f32 %v182, %v219
    %v221 = vmul.f32 %v187, %v219
    %v222 = vmul.f32 %v192, %v219
    %v223 = vmul.f32 %v197, %v219
    %v224 = vmul.f32 %v202, %v219
    %v225 = vmul.f32 %v207, %v219
    %v226 = vmul.f32 %v212, %v219
    %v227 = vmul.f32 %v217, %v219
    %v228 = vadd.f32 %v151, %v220
    %v229 = vadd.f32 %v152, %v221
    %v230 = vadd.f32 %v153, %v222
    %v231 = vadd.f32 %v154, %v223
    %v232 = vadd.f32 %v155, %v224
    %v233 = vadd.f32 %v156, %v225
    %v234 = vadd.f32 %v157, %v226
    %v235 = vadd.f32 %v158, %v227
    %v236 = vld [vmem:[%s0] sm:$0xf]
    %v237 = vld [vmem:[%s0 + $0x4] sm:$0xf]
    %v238 = vld [vmem:[%s0 + $0x8] sm:$0x1]
    %v239 = vld [vmem:[%s0 + $0xc] sm:$0xf]
    %v240 = vld [vmem:[%s0 + $0x10] sm:$0xf]
    %v241 = vld [vmem:[%s0 + $0x14] sm:$0x1]
    %v242 = vld [vmem:[%s0 + $0x18] sm:$0xf]
    %v243 = vld [vmem:[%s0 + $0x1c] sm:$0xf]
    %v244 = vld [vmem:[%s0 + $0x20] sm:$0x1]
    %v245 = vld [vmem:[%s0 + $0x24] sm:$0xf]
    %v246 = vld [vmem:[%s0 + $0x28] sm:$0xf]
    %v247 = vld [vmem:[%s0 + $0x2c] sm:$0x1]
    %vm248 = vsmask.f32 3328
    %vm249 = vsmask.f32 7440
    %vm250 = vmor %vm248, %vm249
    %v252 = vshrl.u32 %v236, 16
    %v254 = vrot.slane %v252, 4
    %v255 = vshll.u32 %v236, 16
    %v257 = vrot.slane %v255, 5
    %v258 = vor.u32 %v254, %v257
    %v259 = vrot.slane %v258, 4
    %v261 = vshll.u32 %v237, 16
    %v263 = vrot.slane %v261, 5
    %v264 = vsel %vm250, %v259, %v263
    %v265 = vshrl.u32 %v237, 16
    %v267 = vrot.slane %v265, 4
    %v268 = vor.u32 %v267, %v263
    %v269 = vrot.slane %v268, 4
    %v271 = vshll.u32 %v238, 16
    %v273 = vrot.slane %v271, 5
    %v274 = vsel %vm250, %v269, %v273
    %v276 = vshrl.u32 %v239, 16
    %v278 = vrot.slane %v276, 4
    %v279 = vshll.u32 %v239, 16
    %v281 = vrot.slane %v279, 5
    %v282 = vor.u32 %v278, %v281
    %v283 = vrot.slane %v282, 4
    %v285 = vshll.u32 %v240, 16
    %v287 = vrot.slane %v285, 5
    %v288 = vsel %vm250, %v283, %v287
    %v289 = vshrl.u32 %v240, 16
    %v291 = vrot.slane %v289, 4
    %v292 = vor.u32 %v291, %v287
    %v293 = vrot.slane %v292, 4
    %v295 = vshll.u32 %v241, 16
    %v297 = vrot.slane %v295, 5
    %v298 = vsel %vm250, %v293, %v297
    %v300 = vshrl.u32 %v242, 16
    %v302 = vrot.slane %v300, 4
    %v303 = vshll.u32 %v242, 16
    %v305 = vrot.slane %v303, 5
    %v306 = vor.u32 %v302, %v305
    %v307 = vrot.slane %v306, 4
    %v309 = vshll.u32 %v243, 16
    %v311 = vrot.slane %v309, 5
    %v312 = vsel %vm250, %v307, %v311
    %v313 = vshrl.u32 %v243, 16
    %v315 = vrot.slane %v313, 4
    %v316 = vor.u32 %v315, %v311
    %v317 = vrot.slane %v316, 4
    %v319 = vshll.u32 %v244, 16
    %v321 = vrot.slane %v319, 5
    %v322 = vsel %vm250, %v317, %v321
    %v324 = vshrl.u32 %v245, 16
    %v326 = vrot.slane %v324, 4
    %v327 = vshll.u32 %v245, 16
    %v329 = vrot.slane %v327, 5
    %v330 = vor.u32 %v326, %v329
    %v331 = vrot.slane %v330, 4
    %v333 = vshll.u32 %v246, 16
    %v335 = vrot.slane %v333, 5
    %v336 = vsel %vm250, %v331, %v335
    %v337 = vshrl.u32 %v246, 16
    %v339 = vrot.slane %v337, 4
    %v340 = vor.u32 %v339, %v335
    %v341 = vrot.slane %v340, 4
    %v343 = vshll.u32 %v247, 16
    %v345 = vrot.slane %v343, 5
    %v346 = vsel %vm250, %v341, %v345
    %v355 = vunpack.c.l.bf16 %v264
    %v356 = vunpack.c.l.bf16 %v274
    %v357 = vunpack.c.l.bf16 %v288
    %v358 = vunpack.c.l.bf16 %v298
    %v359 = vunpack.c.l.bf16 %v312
    %v360 = vunpack.c.l.bf16 %v322
    %v361 = vunpack.c.l.bf16 %v336
    %v362 = vunpack.c.l.bf16 %v346
    %s363 = scalar_lea.vmem %s1, 3
    %v364 = vld [vmem:[%s363] sm:$0x1]
    %v365 = vunpack.c.l.bf16 %v364
    %367 = vset.pattern.permute.xlu0 0
    %368 = vperm.xlu0 %367, %v355
    %v369 = vpop.permute.xlu0 %368
    %372 = vset.pattern.permute.xlu0 0
    %373 = vperm.xlu0 %372, %v356
    %v374 = vpop.permute.xlu0 %373
    %377 = vset.pattern.permute.xlu0 0
    %378 = vperm.xlu0 %377, %v357
    %v379 = vpop.permute.xlu0 %378
    %382 = vset.pattern.permute.xlu0 0
    %383 = vperm.xlu0 %382, %v358
    %v384 = vpop.permute.xlu0 %383
    %387 = vset.pattern.permute.xlu0 0
    %388 = vperm.xlu0 %387, %v359
    %v389 = vpop.permute.xlu0 %388
    %392 = vset.pattern.permute.xlu0 0
    %393 = vperm.xlu0 %392, %v360
    %v394 = vpop.permute.xlu0 %393
    %397 = vset.pattern.permute.xlu0 0
    %398 = vperm.xlu0 %397, %v361
    %v399 = vpop.permute.xlu0 %398
    %402 = vset.pattern.permute.xlu0 0
    %403 = vperm.xlu0 %402, %v362
    %v404 = vpop.permute.xlu0 %403
    %v406 = vperm.slane %v365, 0
    %v407 = vmul.f32 %v369, %v406
    %v408 = vmul.f32 %v374, %v406
    %v409 = vmul.f32 %v379, %v406
    %v410 = vmul.f32 %v384, %v406
    %v411 = vmul.f32 %v389, %v406
    %v412 = vmul.f32 %v394, %v406
    %v413 = vmul.f32 %v399, %v406
    %v414 = vmul.f32 %v404, %v406
    %v415 = vadd.f32 %v228, %v407
    %v416 = vadd.f32 %v229, %v408
    %v417 = vadd.f32 %v230, %v409
    %v418 = vadd.f32 %v231, %v410
    %v419 = vadd.f32 %v232, %v411
    %v420 = vadd.f32 %v233, %v412
    %v421 = vadd.f32 %v234, %v413
    %v422 = vadd.f32 %v235, %v414
    %v423 = vld [vmem:[%s82] sm:$0xf]
    %v424 = vld [vmem:[%s82 + $0x4] sm:$0xf]
    %v425 = vld [vmem:[%s82 + $0x8] sm:$0x1]
    %v426 = vld [vmem:[%s82 + $0xc] sm:$0xf]
    %v427 = vld [vmem:[%s82 + $0x10] sm:$0xf]
    %v428 = vld [vmem:[%s82 + $0x14] sm:$0x1]
    %v429 = vld [vmem:[%s82 + $0x18] sm:$0xf]
    %v430 = vld [vmem:[%s82 + $0x1c] sm:$0xf]
    %v431 = vld [vmem:[%s82 + $0x20] sm:$0x1]
    %v432 = vld [vmem:[%s82 + $0x24] sm:$0xf]
    %v433 = vld [vmem:[%s82 + $0x28] sm:$0xf]
    %v434 = vld [vmem:[%s82 + $0x2c] sm:$0x1]
    %v436 = vshrl.u32 %v423, 16
    %v438 = vrot.slane %v436, 4
    %v439 = vshll.u32 %v423, 16
    %v441 = vrot.slane %v439, 5
    %v442 = vor.u32 %v438, %v441
    %v443 = vrot.slane %v442, 4
    %v445 = vshll.u32 %v424, 16
    %v447 = vrot.slane %v445, 5
    %v448 = vsel %vm250, %v443, %v447
    %v449 = vshrl.u32 %v424, 16
    %v451 = vrot.slane %v449, 4
    %v452 = vor.u32 %v451, %v447
    %v453 = vrot.slane %v452, 4
    %v455 = vshll.u32 %v425, 16
    %v457 = vrot.slane %v455, 5
    %v458 = vsel %vm250, %v453, %v457
    %v460 = vshrl.u32 %v426, 16
    %v462 = vrot.slane %v460, 4
    %v463 = vshll.u32 %v426, 16
    %v465 = vrot.slane %v463, 5
    %v466 = vor.u32 %v462, %v465
    %v467 = vrot.slane %v466, 4
    %v469 = vshll.u32 %v427, 16
    %v471 = vrot.slane %v469, 5
    %v472 = vsel %vm250, %v467, %v471
    %v473 = vshrl.u32 %v427, 16
    %v475 = vrot.slane %v473, 4
    %v476 = vor.u32 %v475, %v471
    %v477 = vrot.slane %v476, 4
    %v479 = vshll.u32 %v428, 16
    %v481 = vrot.slane %v479, 5
    %v482 = vsel %vm250, %v477, %v481
    %v484 = vshrl.u32 %v429, 16
    %v486 = vrot.slane %v484, 4
    %v487 = vshll.u32 %v429, 16
    %v489 = vrot.slane %v487, 5
    %v490 = vor.u32 %v486, %v489
    %v491 = vrot.slane %v490, 4
    %v493 = vshll.u32 %v430, 16
    %v495 = vrot.slane %v493, 5
    %v496 = vsel %vm250, %v491, %v495
    %v497 = vshrl.u32 %v430, 16
    %v499 = vrot.slane %v497, 4
    %v500 = vor.u32 %v499, %v495
    %v501 = vrot.slane %v500, 4
    %v503 = vshll.u32 %v431, 16
    %v505 = vrot.slane %v503, 5
    %v506 = vsel %vm250, %v501, %v505
    %v508 = vshrl.u32 %v432, 16
    %v510 = vrot.slane %v508, 4
    %v511 = vshll.u32 %v432, 16
    %v513 = vrot.slane %v511, 5
    %v514 = vor.u32 %v510, %v513
    %v515 = vrot.slane %v514, 4
    %v517 = vshll.u32 %v433, 16
    %v519 = vrot.slane %v517, 5
    %v520 = vsel %vm250, %v515, %v519
    %v521 = vshrl.u32 %v433, 16
    %v523 = vrot.slane %v521, 4
    %v524 = vor.u32 %v523, %v519
    %v525 = vrot.slane %v524, 4
    %v527 = vshll.u32 %v434, 16
    %v529 = vrot.slane %v527, 5
    %v530 = vsel %vm250, %v525, %v529
    %v539 = vunpack.c.l.bf16 %v448
    %v540 = vunpack.c.l.bf16 %v458
    %v541 = vunpack.c.l.bf16 %v472
    %v542 = vunpack.c.l.bf16 %v482
    %v543 = vunpack.c.l.bf16 %v496
    %v544 = vunpack.c.l.bf16 %v506
    %v545 = vunpack.c.l.bf16 %v520
    %v546 = vunpack.c.l.bf16 %v530
    %s547 = scalar_lea.vmem %s1, 4
    %v548 = vld [vmem:[%s547] sm:$0x1]
    %v549 = vunpack.c.l.bf16 %v548
    %551 = vset.pattern.permute.xlu0 0
    %552 = vperm.xlu0 %551, %v539
    %v553 = vpop.permute.xlu0 %552
    %556 = vset.pattern.permute.xlu0 0
    %557 = vperm.xlu0 %556, %v540
    %v558 = vpop.permute.xlu0 %557
    %561 = vset.pattern.permute.xlu0 0
    %562 = vperm.xlu0 %561, %v541
    %v563 = vpop.permute.xlu0 %562
    %566 = vset.pattern.permute.xlu0 0
    %567 = vperm.xlu0 %566, %v542
    %v568 = vpop.permute.xlu0 %567
    %571 = vset.pattern.permute.xlu0 0
    %572 = vperm.xlu0 %571, %v543
    %v573 = vpop.permute.xlu0 %572
    %576 = vset.pattern.permute.xlu0 0
    %577 = vperm.xlu0 %576, %v544
    %v578 = vpop.permute.xlu0 %577
    %581 = vset.pattern.permute.xlu0 0
    %582 = vperm.xlu0 %581, %v545
    %v583 = vpop.permute.xlu0 %582
    %586 = vset.pattern.permute.xlu0 0
    %587 = vperm.xlu0 %586, %v546
    %v588 = vpop.permute.xlu0 %587
    %v590 = vperm.slane %v549, 0
    %v591 = vmul.f32 %v553, %v590
    %v592 = vmul.f32 %v558, %v590
    %v593 = vmul.f32 %v563, %v590
    %v594 = vmul.f32 %v568, %v590
    %v595 = vmul.f32 %v573, %v590
    %v596 = vmul.f32 %v578, %v590
    %v597 = vmul.f32 %v583, %v590
    %v598 = vmul.f32 %v588, %v590
    %v599 = vadd.f32 %v415, %v591
    %v600 = vadd.f32 %v416, %v592
    %v601 = vadd.f32 %v417, %v593
    %v602 = vadd.f32 %v418, %v594
    %v603 = vadd.f32 %v419, %v595
    %v604 = vadd.f32 %v420, %v596
    %v605 = vadd.f32 %v421, %v597
    %v606 = vadd.f32 %v422, %v598
    %v607 = vld [vmem:[%s2] sm:$0x1]
    %v609 = vperm.slane %v607, 0
    %v611 = vadd.f32 %v599, %v609
    %v612 = vadd.f32 %v600, %v609
    %v613 = vadd.f32 %v601, %v609
    %v614 = vadd.f32 %v602, %v609
    %v615 = vadd.f32 %v603, %v609
    %v616 = vadd.f32 %v604, %v609
    %v617 = vadd.f32 %v605, %v609
    %v618 = vadd.f32 %v606, %v609
    %vm619 = vcmp.ge.f32.partialorder %v611, 0.0
    %vm620 = vcmp.ge.f32.partialorder %v612, 0.0
    %vm621 = vcmp.ge.f32.partialorder %v613, 0.0
    %vm622 = vcmp.ge.f32.partialorder %v614, 0.0
    %vm623 = vcmp.ge.f32.partialorder %v615, 0.0
    %vm624 = vcmp.ge.f32.partialorder %v616, 0.0
    %vm625 = vcmp.ge.f32.partialorder %v617, 0.0
    %vm626 = vcmp.ge.f32.partialorder %v618, 0.0
    %v627 = vmul.f32 %v611, 0.1
    %v628 = vmul.f32 %v612, 0.1
    %v629 = vmul.f32 %v613, 0.1
    %v630 = vmul.f32 %v614, 0.1
    %v631 = vmul.f32 %v615, 0.1
    %v632 = vmul.f32 %v616, 0.1
    %v633 = vmul.f32 %v617, 0.1
    %v634 = vmul.f32 %v618, 0.1
    %v635 = vsel %vm619, %v611, %v627
    %v636 = vsel %vm620, %v612, %v628
    %v637 = vsel %vm621, %v613, %v629
    %v638 = vsel %vm622, %v614, %v630
    %v639 = vsel %vm623, %v615, %v631
    %v640 = vsel %vm624, %v616, %v632
    %v641 = vsel %vm625, %v617, %v633
    %v642 = vsel %vm626, %v618, %v634
    %v643 = vpack.c.bf16 %v635, %v635
    %v644 = vpack.c.bf16 %v636, %v636
    %v645 = vpack.c.bf16 %v637, %v637
    %v646 = vpack.c.bf16 %v638, %v638
    %v647 = vpack.c.bf16 %v639, %v639
    %v648 = vpack.c.bf16 %v640, %v640
    %v649 = vpack.c.bf16 %v641, %v641
    %v650 = vpack.c.bf16 %v642, %v642
    %651 = vst [vmem:[#allocation2] sm:$0xf] %v643
    %652 = vst [vmem:[#allocation2 + $0x4] sm:$0xf] %v644
    %653 = vst [vmem:[#allocation2 + $0x8] sm:$0xf] %v645
    %654 = vst [vmem:[#allocation2 + $0xc] sm:$0xf] %v646
    %655 = vst [vmem:[#allocation2 + $0x10] sm:$0xf] %v647
    %656 = vst [vmem:[#allocation2 + $0x14] sm:$0xf] %v648
    %657 = vst [vmem:[#allocation2 + $0x18] sm:$0xf] %v649
    %658 = vst [vmem:[#allocation2 + $0x1c] sm:$0xf] %v650
    // Predicated region
    $region14: #{tpu_custom_call.1} parent=1 // pred_check
      _
    $region15: #{tpu_custom_call.1} parent=1 // pred_check_branch
      %660 = sbr.rel (0) target = $region17
    $region16: #{tpu_custom_call.1} parent=1 // pred_region
      %662 = vsyncadd [#allocation3], 0
      %s663 = sshll.u32 [#allocation2], 4
      %s664 = int_to_ptr.vmem [resolvable:$true] %s663
      %s665 = sshll.u32 %s3, 4
      %s666 = int_to_ptr.hbm [resolvable:$true] %s665
      %671 = dma.vmem_to_hbm [thread:$0]  %s664, 512, %s666, [#allocation3], 64, 64, 4
    $region17: #{tpu_custom_call.1} parent=1 // pred_fallthru
      _
    // Predicated region
    $region18: #{tpu_custom_call.1} parent=1 // pred_check
      _
    $region19: #{tpu_custom_call.1} parent=1 // pred_check_branch
      %673 = sbr.rel (0) target = $region21
    $region20: #{tpu_custom_call.1} parent=1 // pred_region
      %675 = dma.done [#allocation3], 512
    $region21: #{tpu_custom_call.1} parent=1 // pred_fallthru
      _
    %676 = vsyncpa [#allocation3], 1

</llo_original>
